<compile_context>
chip_gen: v7x
topology: tpu7x:2x2x1
jax: 0.10.0
libtpu: 0.0.40
codegen_flags: <defaults>
</compile_context>

<pallas_src>
import jax
import jax.numpy as jnp
from jax.experimental import pallas as pl
from jax.experimental.pallas import tpu as pltpu


def _round_up(x, m):
    return (x + m - 1) // m * m


def _make_kernel(num_pos, cpad, total_char):
    def kernel(chars_ref, emb_ref, w_ref, mb_ref, out_ref):
        # chars_ref: (T, Wc)             bf16  flattened char embeddings (Wc = L*Cin)
        # emb_ref  : (T, D)              f32   gathered word embeddings
        # w_ref    : (Wc, num_pos*cpad)  bf16  block-banded fused conv weights
        # mb_ref   : (1, num_pos*cpad)   f32   bias (valid cols) / -1e30 (masked cols)
        # out_ref  : (T, total_char+D)   f32   [char features | word embedding]
        s = jnp.dot(chars_ref[...], w_ref[...],
                    preferred_element_type=jnp.float32)      # one big MXU matmul
        s = s + mb_ref[...]                                   # bias + mask (pre-max ok)
        acc = s[:, 0:cpad]                                     # 128-aligned lane slices
        for p in range(1, num_pos):                            # static unrolled max-pool
            acc = jnp.maximum(acc, s[:, p * cpad:(p + 1) * cpad])
        char_feat = jnp.tanh(acc)                              # one tanh per tile (hoisted)
        # Two sliced stores (no concatenate temp / lane-shift merge).
        out_ref[:, :total_char] = char_feat[:, :total_char].astype(out_ref.dtype)
        out_ref[:, total_char:] = emb_ref[...].astype(out_ref.dtype)
    return kernel


def word_representation_forward(word_ids, char_embs, emb_table, conv_params,
                                *, tile_n=1024):
    """Returns (embedOut, finalCharOut, finalWordOut) like the torch module."""
    B, S = word_ids.shape
    _, _, L, Cin = char_embs.shape
    D = emb_table.shape[1]

    # Embedding lookup (gather glue); forward of padding_idx == plain gather.
    embed_out = jnp.take(emb_table, word_ids, axis=0)                  # (B, S, D) f32

    ks = [int(w.shape[0]) for w, _ in conv_params]
    couts = [int(w.shape[2]) for w, _ in conv_params]
    k_min, k_max = min(ks), max(ks)
    assert L >= k_max, "every n-gram needs >= 1 valid position (L >= maxNgrams)"
    total_char = sum(couts)
    num_pos = L - k_min + 1
    cpad = _round_up(total_char, 128)        # per-position lane-aligned column block
    Wc = L * Cin                             # flattened char width (no extra padding)

    # Fused per-position weight: n-gram k occupies rows [0, k*Cin) of (k_max*Cin, total_char).
    w_cols, b_cols = [], []
    for (w, b), k in zip(conv_params, ks):
        wf = w.reshape(k * Cin, -1).astype(jnp.float32)
        w_cols.append(jnp.pad(wf, ((0, (k_max - k) * Cin), (0, 0))))
        b_cols.append(jnp.asarray(b, jnp.float32).reshape(-1))
    w_fused = jnp.concatenate(w_cols, axis=1)                  # (k_max*Cin, total_char)

    # Block-banded weight: position p's block at row offset p*Cin, column block p.
    # Rows truncated past Wc only affect columns that are masked at that position.
    band_cols = []
    for p in range(num_pos):
        rows = min(k_max * Cin, Wc - p * Cin)
        blk = jnp.pad(w_fused[:rows, :],
                      ((p * Cin, Wc - p * Cin - rows), (0, cpad - total_char)))
        band_cols.append(blk)
    w_band = jnp.concatenate(band_cols, axis=1).astype(jnp.bfloat16)   # (Wc, num_pos*cpad)

    # Bias + mask row per position block: bias where the owning n-gram fits (p <= L-k),
    # -1e30 otherwise.  Hoisting bias/tanh past the max is valid since position 0 is
    # valid for every n-gram (L >= k_max asserted above).
    mb_cols = []
    for p in range(num_pos):
        segs = [b if p <= L - k else jnp.full((c,), -1e30, jnp.float32)
                for b, c, k in zip(b_cols, couts, ks)]
        mb_cols.append(jnp.pad(jnp.concatenate(segs), (0, cpad - total_char)))
    maskbias = jnp.concatenate(mb_cols).reshape(1, num_pos * cpad)     # f32

    # Word-axis tiling: >= 2 grid steps when N allows (v7x dual-TC sharding), tile a
    # multiple of 16 (bf16 packing), padding bounded by one tile of rows.
    N = B * S
    tile = max(16, min(tile_n, _round_up(-(-N // 2), 16)))
    n_pad = _round_up(N, tile)

    chars_flat = char_embs.reshape(N, Wc).astype(jnp.bfloat16)
    chars_flat = jnp.pad(chars_flat, ((0, n_pad - N), (0, 0)))
    emb_flat = jnp.pad(embed_out.reshape(N, D).astype(jnp.float32),
                       ((0, n_pad - N), (0, 0)))

    kernel = _make_kernel(num_pos, cpad, total_char)

    out = pl.pallas_call(
        kernel,
        out_shape=jax.ShapeDtypeStruct((n_pad, total_char + D), jnp.float32),
        grid=(n_pad // tile,),
        in_specs=[
            pl.BlockSpec((tile, Wc), lambda i: (i, 0)),
            pl.BlockSpec((tile, D), lambda i: (i, 0)),
            pl.BlockSpec((Wc, num_pos * cpad), lambda i: (0, 0)),   # VMEM-resident weights
            pl.BlockSpec((1, num_pos * cpad), lambda i: (0, 0)),    # VMEM-resident bias/mask
        ],
        out_specs=pl.BlockSpec((tile, total_char + D), lambda i: (i, 0)),
        compiler_params=pltpu.CompilerParams(
            dimension_semantics=("parallel",),
            # ~12 MB at tile=1024; on v6e (128 MiB VMEM) tile_n=2048-4096 with a larger
            # limit is fine; keep under the 64 MiB physical ceiling on v7x.
            vmem_limit_bytes=32 * 1024 * 1024),
    )(chars_flat, emb_flat, w_band, maskbias)

    out = out[:N]
    final_char_out = out[:, :total_char].reshape(B, S, total_char)
    # dropout == identity (eval); finalWordOut is just the lane-dense kernel output.
    final_word_out = out.reshape(B, S, total_char + D)
    return embed_out, final_char_out, final_word_out


def _reference(word_ids, char_embs, emb_table, conv_params):
    """Pure-JAX (f32) reference of the same forward semantics."""
    embed_out = jnp.take(emb_table, word_ids, axis=0)
    L = char_embs.shape[2]
    char_outs = []
    for w, b in conv_params:
        k = w.shape[0]
        pos = []
        for p in range(L - k + 1):
            window = char_embs[:, :, p:p + k, :]                     # (B, S, k, Cin)
            h = jnp.einsum("bskc,kco->bso", window, w) + b
            pos.append(jnp.tanh(h))
        char_outs.append(jnp.max(jnp.stack(pos, axis=0), axis=0))
    final_char = jnp.concatenate(char_outs, axis=2)
    final_word = jnp.concatenate([final_char, embed_out], axis=2)
    return embed_out, final_char, final_word


if __name__ == "__main__":
    # Module hyper-params (small, consistent with the __init__ signature)
    vocabularySize, embedDimension = 50, 32
    minNgrams, maxNgrams = 2, 4
    charInputDim, charOutDim = 16, 32
    B, S, L = 2, 8, 12                     # batch, sentence length, max chars per word
    num_ngrams = maxNgrams - minNgrams + 1

    keys = jax.random.split(jax.random.PRNGKey(0), 3 + num_ngrams)
    k_emb, k_ids, k_chars = keys[0], keys[1], keys[2]
    k_ngrams = keys[3:]

    # init_embedding (vocab, embedDim); zero the padding row like padding_idx=0 init
    init_embedding = jax.random.normal(
        k_emb, (vocabularySize, embedDimension), jnp.float32) * 0.1
    init_embedding = init_embedding.at[0].set(0.0)

    # x = (word ids, per-word char embeddings)
    word_ids = jax.random.randint(k_ids, (B, S), 0, vocabularySize)
    char_embs = jax.random.normal(k_chars, (B, S, L, charInputDim), jnp.float32)

    # Conv params per n-gram size (equivalent to Conv2d(1, charOutDim, (k, charInputDim)))
    conv_params = []
    for ng, kk in zip(range(minNgrams, maxNgrams + 1), k_ngrams):
        kw, kb = jax.random.split(kk)
        w = jax.random.normal(kw, (ng, charInputDim, charOutDim), jnp.float32)
        w = w * (1.0 / (ng * charInputDim) ** 0.5)
        b = jax.random.normal(kb, (charOutDim,), jnp.float32) * 0.01
        conv_params.append((w, b))

    outs = word_representation_forward(word_ids, char_embs, init_embedding, conv_params)
    outs = jax.block_until_ready(outs)

    refs = _reference(word_ids, char_embs, init_embedding, conv_params)
    names = ("embedOut", "finalCharOut", "finalWordOut")
    for name, o, r in zip(names, outs, refs):
        assert o.shape == r.shape, (name, o.shape, r.shape)
        err = float(jnp.max(jnp.abs(o.astype(jnp.float32) - r)))
        # bf16 MXU inputs (f32 accumulate) -> slightly looser tolerance than pure f32
        assert jnp.allclose(o, r, atol=2e-2, rtol=2e-2), (name, err)

    print("KERNEL_OK")
</pallas_src>

<mosaic_0001>
module attributes {stable_mosaic.version = 11 : i64} {
  func.func @kernel(%arg0: i32, %arg1: memref<16x192xbf16, #tpu.memory_space<vmem>>, %arg2: memref<16x32xf32, #tpu.memory_space<vmem>>, %arg3: memref<192x1408xbf16, #tpu.memory_space<vmem>>, %arg4: memref<1x1408xf32, #tpu.memory_space<vmem>>, %arg5: memref<16x128xf32, #tpu.memory_space<vmem>>) attributes {dimension_semantics = [#tpu.dimension_semantics<parallel>], iteration_bounds = array<i64: 1>, scalar_prefetch = 0 : i64, scratch_operands = 0 : i64, tpu.core_type = #tpu.core_type<tc>, window_params = [{transform_indices = @transform_0, window_bounds = array<i64: 16, 192>}, {transform_indices = @transform_1, window_bounds = array<i64: 16, 32>}, {pipeline_mode = #tpu.pipeline_mode<synchronous>, transform_indices = @transform_2, window_bounds = array<i64: 192, 1408>}, {pipeline_mode = #tpu.pipeline_mode<synchronous>, transform_indices = @transform_3, window_bounds = array<i64: 1, 1408>}, {transform_indices = @transform_4, window_bounds = array<i64: 16, 128>}]} {
    %c0 = arith.constant 0 : index
    %c0_0 = arith.constant 0 : index
    %0 = vector.load %arg1[%c0, %c0_0] : memref<16x192xbf16, #tpu.memory_space<vmem>>, vector<16x192xbf16>
    %c0_1 = arith.constant 0 : index
    %c0_2 = arith.constant 0 : index
    %1 = vector.load %arg3[%c0_1, %c0_2] : memref<192x1408xbf16, #tpu.memory_space<vmem>>, vector<192x1408xbf16>
    %cst = arith.constant dense<0.000000e+00> : vector<16x1408xf32>
    %2 = tpu.matmul %0, %1, %cst {dimension_numbers = #tpu.dot_dimension_numbers<[1], [0], [0], [1], [0, 0, 1, 1], [], []>} : vector<16x192xbf16>, vector<192x1408xbf16>, vector<16x1408xf32> -> vector<16x1408xf32>
    %c0_3 = arith.constant 0 : index
    %c0_4 = arith.constant 0 : index
    %3 = vector.load %arg4[%c0_3, %c0_4] : memref<1x1408xf32, #tpu.memory_space<vmem>>, vector<1x1408xf32>
    %4 = vector.broadcast %3 : vector<1x1408xf32> to vector<16x1408xf32>
    %5 = arith.addf %2, %4 : vector<16x1408xf32>
    %6 = vector.extract_strided_slice %5 {offsets = [0, 0], sizes = [16, 128], strides = [1, 1]} : vector<16x1408xf32> to vector<16x128xf32>
    %7 = vector.extract_strided_slice %5 {offsets = [0, 128], sizes = [16, 128], strides = [1, 1]} : vector<16x1408xf32> to vector<16x128xf32>
    %8 = arith.maximumf %6, %7 : vector<16x128xf32>
    %9 = vector.extract_strided_slice %5 {offsets = [0, 256], sizes = [16, 128], strides = [1, 1]} : vector<16x1408xf32> to vector<16x128xf32>
    %10 = arith.maximumf %8, %9 : vector<16x128xf32>
    %11 = vector.extract_strided_slice %5 {offsets = [0, 384], sizes = [16, 128], strides = [1, 1]} : vector<16x1408xf32> to vector<16x128xf32>
    %12 = arith.maximumf %10, %11 : vector<16x128xf32>
    %13 = vector.extract_strided_slice %5 {offsets = [0, 512], sizes = [16, 128], strides = [1, 1]} : vector<16x1408xf32> to vector<16x128xf32>
    %14 = arith.maximumf %12, %13 : vector<16x128xf32>
    %15 = vector.extract_strided_slice %5 {offsets = [0, 640], sizes = [16, 128], strides = [1, 1]} : vector<16x1408xf32> to vector<16x128xf32>
    %16 = arith.maximumf %14, %15 : vector<16x128xf32>
    %17 = vector.extract_strided_slice %5 {offsets = [0, 768], sizes = [16, 128], strides = [1, 1]} : vector<16x1408xf32> to vector<16x128xf32>
    %18 = arith.maximumf %16, %17 : vector<16x128xf32>
    %19 = vector.extract_strided_slice %5 {offsets = [0, 896], sizes = [16, 128], strides = [1, 1]} : vector<16x1408xf32> to vector<16x128xf32>
    %20 = arith.maximumf %18, %19 : vector<16x128xf32>
    %21 = vector.extract_strided_slice %5 {offsets = [0, 1024], sizes = [16, 128], strides = [1, 1]} : vector<16x1408xf32> to vector<16x128xf32>
    %22 = arith.maximumf %20, %21 : vector<16x128xf32>
    %23 = vector.extract_strided_slice %5 {offsets = [0, 1152], sizes = [16, 128], strides = [1, 1]} : vector<16x1408xf32> to vector<16x128xf32>
    %24 = arith.maximumf %22, %23 : vector<16x128xf32>
    %25 = vector.extract_strided_slice %5 {offsets = [0, 1280], sizes = [16, 128], strides = [1, 1]} : vector<16x1408xf32> to vector<16x128xf32>
    %26 = arith.maximumf %24, %25 : vector<16x128xf32>
    %27 = math.tanh %26 : vector<16x128xf32>
    %28 = vector.extract_strided_slice %27 {offsets = [0, 0], sizes = [16, 96], strides = [1, 1]} : vector<16x128xf32> to vector<16x96xf32>
    %c0_5 = arith.constant 0 : index
    %c0_6 = arith.constant 0 : index
    %29 = vector.load %arg5[%c0_5, %c0_6] : memref<16x128xf32, #tpu.memory_space<vmem>>, vector<16x96xf32>
    tpu.vector_store %arg5[%c0_5, %c0_6], %28 {strides = array<i32>} : memref<16x128xf32, #tpu.memory_space<vmem>>, vector<16x96xf32>,
    %c0_7 = arith.constant 0 : index
    %c0_8 = arith.constant 0 : index
    %30 = vector.load %arg2[%c0_7, %c0_8] : memref<16x32xf32, #tpu.memory_space<vmem>>, vector<16x32xf32>
    %c0_9 = arith.constant 0 : index
    %c96 = arith.constant 96 : index
    %31 = vector.load %arg5[%c0_9, %c96] : memref<16x128xf32, #tpu.memory_space<vmem>>, vector<16x32xf32>
    tpu.vector_store %arg5[%c0_9, %c96], %30 {strides = array<i32>} : memref<16x128xf32, #tpu.memory_space<vmem>>, vector<16x32xf32>,
    return
  }
  func.func @transform_0(%arg0: i32) -> (i32, i32) {
    %c0_i32 = arith.constant 0 : i32
    %c0_i32_0 = arith.constant 0 : i32
    return %arg0, %c0_i32 : i32, i32
  }
  func.func @transform_1(%arg0: i32) -> (i32, i32) {
    %c0_i32 = arith.constant 0 : i32
    %c0_i32_0 = arith.constant 0 : i32
    return %arg0, %c0_i32 : i32, i32
  }
  func.func @transform_2(%arg0: i32) -> (i32, i32) {
    %c0_i32 = arith.constant 0 : i32
    %c0_i32_0 = arith.constant 0 : i32
    %c0_i32_1 = arith.constant 0 : i32
    return %c0_i32, %c0_i32_0 : i32, i32
  }
  func.func @transform_3(%arg0: i32) -> (i32, i32) {
    %c0_i32 = arith.constant 0 : i32
    %c0_i32_0 = arith.constant 0 : i32
    %c0_i32_1 = arith.constant 0 : i32
    return %c0_i32, %c0_i32_0 : i32, i32
  }
  func.func @transform_4(%arg0: i32) -> (i32, i32) {
    %c0_i32 = arith.constant 0 : i32
    %c0_i32_0 = arith.constant 0 : i32
    return %arg0, %c0_i32 : i32, i32
  }
}

</mosaic_0001>

<llo_original>
// kernel: tpu_custom_call.1
$region0: #{tpu_custom_call.1}
  #allocation0 [shape = 'u32[]', space=smem, size = 0x4, offset = 0x4, fixed_abs, tag = 'smem constant byte address 0x4 - core index']
  #allocation1 [shape = 'u32[144,128]{1,0:T(1,128)}', space=vmem, size = 0x12000, scoped, tag = 'internal scratch']
  %s0 = inlined_call_operand.hbm [shape: bf16[16,192], index: 0, kind: input, shape index: {}]
  %s1 = inlined_call_operand.hbm [shape: f32[16,32], index: 1, kind: input, shape index: {}]
  %s2 = inlined_call_operand.hbm [shape: bf16[192,1408], index: 2, kind: input, shape index: {}]
  %s3 = inlined_call_operand.vmem [shape: f32[1,1408], index: 3, kind: input, shape index: {}]
  %s4 = inlined_call_operand.hbm [shape: f32[16,128], index: 4, kind: output, shape index: {}]
  %s5 = sld [smem:[#allocation0]]
  $region38: #{tpu_custom_call.1} parent=0
    _
  %s7 = ssub.s32 1, %s5
  %s8 = scalar_select 0, %s7, %s5
  $region1: #{tpu_custom_call.1} parent=0
    #allocation2 [shape = 'u8[8192]{0}', space=vmem, size = 0x2000, scoped, tag = 'input window, operand 0, single buffered']
    #allocation3 [shape = 's32[1]{0}', space=sflag, size = 0x4, scoped, tag = 'scoped memory for tpu_custom_call.1']
    #allocation4 [shape = 's32[1]{0}', space=sflag, size = 0x4, scoped, tag = 'scoped memory for tpu_custom_call.1']
    #allocation5 [shape = 'u8[8192]{0}', space=vmem, size = 0x2000, scoped, tag = 'input window, operand 1, single buffered']
    #allocation6 [shape = 's32[1]{0}', space=sflag, size = 0x4, scoped, tag = 'scoped memory for tpu_custom_call.1']
    #allocation7 [shape = 'u8[540672]{0}', space=vmem, size = 0x84000, scoped, tag = 'input window, operand 2, single buffered']
    #allocation8 [shape = 'u8[8192]{0}', space=vmem, size = 0x2000, scoped, tag = 'output window, operand 0, single buffered']
    %9 = vsyncpa [#allocation3], 0
    %10 = vsyncpa [#allocation6], 0
    %11 = vsyncpa [#allocation4], 0
    // Predicated region
    $region2: #{tpu_custom_call.1} parent=1 // pred_check
      _
    $region3: #{tpu_custom_call.1} parent=1 // pred_check_branch
      %13 = sbr.rel (0) target = $region5
    $region4: #{tpu_custom_call.1} parent=1 // pred_region
      %s15 = ssub.s32 256, 256
      %16 = vsyncadd [#allocation3], %s15
      %s17 = sshll.u32 [#allocation2], 4
      %s18 = int_to_ptr.vmem [resolvable:$true] %s17
      %23 = dma.hbm_to_vmem [thread:$0]  %s0, 256, %s18, [#allocation3], 128, 128, 8
    $region5: #{tpu_custom_call.1} parent=1 // pred_fallthru
      _
    // Predicated region
    $region6: #{tpu_custom_call.1} parent=1 // pred_check
      _
    $region7: #{tpu_custom_call.1} parent=1 // pred_check_branch
      %25 = sbr.rel (0) target = $region9
    $region8: #{tpu_custom_call.1} parent=1 // pred_region
      %s27 = ssub.s32 256, 256
      %28 = vsyncadd [#allocation6], %s27
      %s29 = sshll.u32 [#allocation5], 4
      %s30 = int_to_ptr.vmem [resolvable:$true] %s29
      %35 = dma.hbm_to_vmem [thread:$0]  %s1, 256, %s30, [#allocation6], 128, 128, 8
    $region9: #{tpu_custom_call.1} parent=1 // pred_fallthru
      _
    // Predicated region
    $region10: #{tpu_custom_call.1} parent=1 // pred_check
      _
    $region11: #{tpu_custom_call.1} parent=1 // pred_check_branch
      %37 = sbr.rel (0) target = $region13
    $region12: #{tpu_custom_call.1} parent=1 // pred_region
      %s39 = ssub.s32 16896, 16896
      %40 = vsyncadd [#allocation6], %s39
      %s41 = sshll.u32 [#allocation7], 4
      %s42 = int_to_ptr.vmem [resolvable:$true] %s41
      %47 = dma.hbm_to_vmem [thread:$0]  %s2, 16896, %s42, [#allocation6], 704, 704, 44
    $region13: #{tpu_custom_call.1} parent=1 // pred_fallthru
      _
    // Predicated region
    $region14: #{tpu_custom_call.1} parent=1 // pred_check
      _
    $region15: #{tpu_custom_call.1} parent=1 // pred_check_branch
      %49 = sbr.rel (0) target = $region17
    $region16: #{tpu_custom_call.1} parent=1 // pred_region
      _
    $region17: #{tpu_custom_call.1} parent=1 // pred_fallthru
      _
    // Predicated region
    $region18: #{tpu_custom_call.1} parent=1 // pred_check
      _
    $region19: #{tpu_custom_call.1} parent=1 // pred_check_branch
      %51 = sbr.rel (0) target = $region21
    $region20: #{tpu_custom_call.1} parent=1 // pred_region
      %52 = dma.done [#allocation3], 256
    $region21: #{tpu_custom_call.1} parent=1 // pred_fallthru
      _
    // Predicated region
    $region22: #{tpu_custom_call.1} parent=1 // pred_check
      _
    $region23: #{tpu_custom_call.1} parent=1 // pred_check_branch
      %54 = sbr.rel (0) target = $region25
    $region24: #{tpu_custom_call.1} parent=1 // pred_region
      %55 = dma.done [#allocation6], 256
    $region25: #{tpu_custom_call.1} parent=1 // pred_fallthru
      _
    // Predicated region
    $region26: #{tpu_custom_call.1} parent=1 // pred_check
      _
    $region27: #{tpu_custom_call.1} parent=1 // pred_check_branch
      %57 = sbr.rel (0) target = $region29
    $region28: #{tpu_custom_call.1} parent=1 // pred_region
      %58 = dma.done [#allocation6], 16896
    $region29: #{tpu_custom_call.1} parent=1 // pred_fallthru
      _
    %v60 = vld [vmem:[#allocation2] sm:$0xff]
    %v61 = vld [vmem:[#allocation2 + $0x8] sm:$0xff]
    %v62 = vld [vmem:[#allocation7] sm:$0xff]
    %v63 = vld [vmem:[#allocation7 + $0x8] sm:$0xff]
    %v64 = vld [vmem:[#allocation7 + $0x10] sm:$0xff]
    %v65 = vld [vmem:[#allocation7 + $0x18] sm:$0xff]
    %v66 = vld [vmem:[#allocation7 + $0x20] sm:$0xff]
    %v67 = vld [vmem:[#allocation7 + $0x28] sm:$0xf]
    %v68 = vld [vmem:[#allocation7 + $0x2c] sm:$0xff]
    %v69 = vld [vmem:[#allocation7 + $0x34] sm:$0xff]
    %v70 = vld [vmem:[#allocation7 + $0x3c] sm:$0xff]
    %v71 = vld [vmem:[#allocation7 + $0x44] sm:$0xff]
    %v72 = vld [vmem:[#allocation7 + $0x4c] sm:$0xff]
    %v73 = vld [vmem:[#allocation7 + $0x54] sm:$0xf]
    %v74 = vld [vmem:[#allocation7 + $0x58] sm:$0xff]
    %v75 = vld [vmem:[#allocation7 + $0x60] sm:$0xff]
    %v76 = vld [vmem:[#allocation7 + $0x68] sm:$0xff]
    %v77 = vld [vmem:[#allocation7 + $0x70] sm:$0xff]
    %v78 = vld [vmem:[#allocation7 + $0x78] sm:$0xff]
    %v79 = vld [vmem:[#allocation7 + $0x80] sm:$0xf]
    %v80 = vld [vmem:[#allocation7 + $0x84] sm:$0xff]
    %v81 = vld [vmem:[#allocation7 + $0x8c] sm:$0xff]
    %v82 = vld [vmem:[#allocation7 + $0x94] sm:$0xff]
    %v83 = vld [vmem:[#allocation7 + $0x9c] sm:$0xff]
    %v84 = vld [vmem:[#allocation7 + $0xa4] sm:$0xff]
    %v85 = vld [vmem:[#allocation7 + $0xac] sm:$0xf]
    %v86 = vld [vmem:[#allocation7 + $0xb0] sm:$0xff]
    %v87 = vld [vmem:[#allocation7 + $0xb8] sm:$0xff]
    %v88 = vld [vmem:[#allocation7 + $0xc0] sm:$0xff]
    %v89 = vld [vmem:[#allocation7 + $0xc8] sm:$0xff]
    %v90 = vld [vmem:[#allocation7 + $0xd0] sm:$0xff]
    %v91 = vld [vmem:[#allocation7 + $0xd8] sm:$0xf]
    %v92 = vld [vmem:[#allocation7 + $0xdc] sm:$0xff]
    %v93 = vld [vmem:[#allocation7 + $0xe4] sm:$0xff]
    %v94 = vld [vmem:[#allocation7 + $0xec] sm:$0xff]
    %v95 = vld [vmem:[#allocation7 + $0xf4] sm:$0xff]
    %v96 = vld [vmem:[#allocation7 + $0xfc] sm:$0xff]
    %v97 = vld [vmem:[#allocation7 + $0x104] sm:$0xf]
    %v98 = vld [vmem:[#allocation7 + $0x108] sm:$0xff]
    %v99 = vld [vmem:[#allocation7 + $0x110] sm:$0xff]
    %v100 = vld [vmem:[#allocation7 + $0x118] sm:$0xff]
    %v101 = vld [vmem:[#allocation7 + $0x120] sm:$0xff]
    %v102 = vld [vmem:[#allocation7 + $0x128] sm:$0xff]
    %v103 = vld [vmem:[#allocation7 + $0x130] sm:$0xf]
    %v104 = vld [vmem:[#allocation7 + $0x134] sm:$0xff]
    %v105 = vld [vmem:[#allocation7 + $0x13c] sm:$0xff]
    %v106 = vld [vmem:[#allocation7 + $0x144] sm:$0xff]
    %v107 = vld [vmem:[#allocation7 + $0x14c] sm:$0xff]
    %v108 = vld [vmem:[#allocation7 + $0x154] sm:$0xff]
    %v109 = vld [vmem:[#allocation7 + $0x15c] sm:$0xf]
    %v110 = vld [vmem:[#allocation7 + $0x160] sm:$0xff]
    %v111 = vld [vmem:[#allocation7 + $0x168] sm:$0xff]
    %v112 = vld [vmem:[#allocation7 + $0x170] sm:$0xff]
    %v113 = vld [vmem:[#allocation7 + $0x178] sm:$0xff]
    %v114 = vld [vmem:[#allocation7 + $0x180] sm:$0xff]
    %v115 = vld [vmem:[#allocation7 + $0x188] sm:$0xf]
    %v116 = vld [vmem:[#allocation7 + $0x18c] sm:$0xff]
    %v117 = vld [vmem:[#allocation7 + $0x194] sm:$0xff]
    %v118 = vld [vmem:[#allocation7 + $0x19c] sm:$0xff]
    %v119 = vld [vmem:[#allocation7 + $0x1a4] sm:$0xff]
    %v120 = vld [vmem:[#allocation7 + $0x1ac] sm:$0xff]
    %v121 = vld [vmem:[#allocation7 + $0x1b4] sm:$0xf]
    %v122 = vld [vmem:[#allocation7 + $0x1b8] sm:$0xff]
    %v123 = vld [vmem:[#allocation7 + $0x1c0] sm:$0xff]
    %v124 = vld [vmem:[#allocation7 + $0x1c8] sm:$0xff]
    %v125 = vld [vmem:[#allocation7 + $0x1d0] sm:$0xff]
    %v126 = vld [vmem:[#allocation7 + $0x1d8] sm:$0xff]
    %v127 = vld [vmem:[#allocation7 + $0x1e0] sm:$0xf]
    %v128 = vld [vmem:[#allocation7 + $0x1e4] sm:$0xff]
    %v129 = vld [vmem:[#allocation7 + $0x1ec] sm:$0xff]
    %v130 = vld [vmem:[#allocation7 + $0x1f4] sm:$0xff]
    %v131 = vld [vmem:[#allocation7 + $0x1fc] sm:$0xff]
    %v132 = vld [vmem:[#allocation7 + $0x204] sm:$0xff]
    %v133 = vld [vmem:[#allocation7 + $0x20c] sm:$0xf]
    %v134 = vld [vmem:[#allocation7 + $0x210] sm:$0xff]
    %v135 = vld [vmem:[#allocation7 + $0x218] sm:$0xff]
    %v136 = vld [vmem:[#allocation7 + $0x220] sm:$0xff]
    %v137 = vld [vmem:[#allocation7 + $0x228] sm:$0xff]
    %v138 = vld [vmem:[#allocation7 + $0x230] sm:$0xff]
    %v139 = vld [vmem:[#allocation7 + $0x238] sm:$0xf]
    %v140 = vld [vmem:[#allocation7 + $0x23c] sm:$0xff]
    %v141 = vld [vmem:[#allocation7 + $0x244] sm:$0xff]
    %v142 = vld [vmem:[#allocation7 + $0x24c] sm:$0xff]
    %v143 = vld [vmem:[#allocation7 + $0x254] sm:$0xff]
    %v144 = vld [vmem:[#allocation7 + $0x25c] sm:$0xff]
    %v145 = vld [vmem:[#allocation7 + $0x264] sm:$0xf]
    %v146 = vld [vmem:[#allocation7 + $0x268] sm:$0xff]
    %v147 = vld [vmem:[#allocation7 + $0x270] sm:$0xff]
    %v148 = vld [vmem:[#allocation7 + $0x278] sm:$0xff]
    %v149 = vld [vmem:[#allocation7 + $0x280] sm:$0xff]
    %v150 = vld [vmem:[#allocation7 + $0x288] sm:$0xff]
    %v151 = vld [vmem:[#allocation7 + $0x290] sm:$0xf]
    %v152 = vld [vmem:[#allocation7 + $0x294] sm:$0xff]
    %v153 = vld [vmem:[#allocation7 + $0x29c] sm:$0xff]
    %v154 = vld [vmem:[#allocation7 + $0x2a4] sm:$0xff]
    %v155 = vld [vmem:[#allocation7 + $0x2ac] sm:$0xff]
    %v156 = vld [vmem:[#allocation7 + $0x2b4] sm:$0xff]
    %v157 = vld [vmem:[#allocation7 + $0x2bc] sm:$0xf]
    %v158 = vld [vmem:[#allocation7 + $0x2c0] sm:$0xff]
    %v159 = vld [vmem:[#allocation7 + $0x2c8] sm:$0xff]
    %v160 = vld [vmem:[#allocation7 + $0x2d0] sm:$0xff]
    %v161 = vld [vmem:[#allocation7 + $0x2d8] sm:$0xff]
    %v162 = vld [vmem:[#allocation7 + $0x2e0] sm:$0xff]
    %v163 = vld [vmem:[#allocation7 + $0x2e8] sm:$0xf]
    %v164 = vld [vmem:[#allocation7 + $0x2ec] sm:$0xff]
    %v165 = vld [vmem:[#allocation7 + $0x2f4] sm:$0xff]
    %v166 = vld [vmem:[#allocation7 + $0x2fc] sm:$0xff]
    %v167 = vld [vmem:[#allocation7 + $0x304] sm:$0xff]
    %v168 = vld [vmem:[#allocation7 + $0x30c] sm:$0xff]
    %v169 = vld [vmem:[#allocation7 + $0x314] sm:$0xf]
    %v170 = vld [vmem:[#allocation7 + $0x318] sm:$0xff]
    %v171 = vld [vmem:[#allocation7 + $0x320] sm:$0xff]
    %v172 = vld [vmem:[#allocation7 + $0x328] sm:$0xff]
    %v173 = vld [vmem:[#allocation7 + $0x330] sm:$0xff]
    %v174 = vld [vmem:[#allocation7 + $0x338] sm:$0xff]
    %v175 = vld [vmem:[#allocation7 + $0x340] sm:$0xf]
    %v176 = vld [vmem:[#allocation7 + $0x344] sm:$0xff]
    %v177 = vld [vmem:[#allocation7 + $0x34c] sm:$0xff]
    %v178 = vld [vmem:[#allocation7 + $0x354] sm:$0xff]
    %v179 = vld [vmem:[#allocation7 + $0x35c] sm:$0xff]
    %v180 = vld [vmem:[#allocation7 + $0x364] sm:$0xff]
    %v181 = vld [vmem:[#allocation7 + $0x36c] sm:$0xf]
    %v182 = vld [vmem:[#allocation7 + $0x370] sm:$0xff]
    %v183 = vld [vmem:[#allocation7 + $0x378] sm:$0xff]
    %v184 = vld [vmem:[#allocation7 + $0x380] sm:$0xff]
    %v185 = vld [vmem:[#allocation7 + $0x388] sm:$0xff]
    %v186 = vld [vmem:[#allocation7 + $0x390] sm:$0xff]
    %v187 = vld [vmem:[#allocation7 + $0x398] sm:$0xf]
    %v188 = vld [vmem:[#allocation7 + $0x39c] sm:$0xff]
    %v189 = vld [vmem:[#allocation7 + $0x3a4] sm:$0xff]
    %v190 = vld [vmem:[#allocation7 + $0x3ac] sm:$0xff]
    %v191 = vld [vmem:[#allocation7 + $0x3b4] sm:$0xff]
    %v192 = vld [vmem:[#allocation7 + $0x3bc] sm:$0xff]
    %v193 = vld [vmem:[#allocation7 + $0x3c4] sm:$0xf]
    %v194 = vld [vmem:[#allocation7 + $0x3c8] sm:$0xff]
    %v195 = vld [vmem:[#allocation7 + $0x3d0] sm:$0xff]
    %v196 = vld [vmem:[#allocation7 + $0x3d8] sm:$0xff]
    %v197 = vld [vmem:[#allocation7 + $0x3e0] sm:$0xff]
    %v198 = vld [vmem:[#allocation7 + $0x3e8] sm:$0xff]
    %v199 = vld [vmem:[#allocation7 + $0x3f0] sm:$0xf]
    %v200 = vld [vmem:[#allocation7 + $0x3f4] sm:$0xff]
    %v201 = vld [vmem:[#allocation7 + $0x3fc] sm:$0xff]
    %v202 = vld [vmem:[#allocation7 + $0x404] sm:$0xff]
    %v203 = vld [vmem:[#allocation7 + $0x40c] sm:$0xff]
    %v204 = vld [vmem:[#allocation7 + $0x414] sm:$0xff]
    %v205 = vld [vmem:[#allocation7 + $0x41c] sm:$0xf]
    %v206 = vld [vmem:[%s3] sm:$0xff]
    %v207 = vld [vmem:[%s3 + $0x8] sm:$0x7]
    %v210 = vlaneseq
    %v211 = vshrl.u32 %v210, 7
    %v212 = vsub.s32 0, %v211
    %v213 = vrot.slane %v206, %v212
    %v214 = vlaneseq
    %v215 = vshrl.u32 %v214, 7
    %v216 = vsub.s32 1, %v215
    %v217 = vrot.slane %v206, %v216
    %v218 = vlaneseq
    %v219 = vshrl.u32 %v218, 7
    %v220 = vsub.s32 2, %v219
    %v221 = vrot.slane %v206, %v220
    %v222 = vlaneseq
    %v223 = vshrl.u32 %v222, 7
    %v224 = vsub.s32 3, %v223
    %v225 = vrot.slane %v206, %v224
    %v226 = vlaneseq
    %v227 = vshrl.u32 %v226, 7
    %v228 = vsub.s32 4, %v227
    %v229 = vrot.slane %v206, %v228
    %v230 = vlaneseq
    %v231 = vshrl.u32 %v230, 7
    %v232 = vsub.s32 5, %v231
    %v233 = vrot.slane %v206, %v232
    %v234 = vlaneseq
    %v235 = vshrl.u32 %v234, 7
    %v236 = vsub.s32 6, %v235
    %v237 = vrot.slane %v206, %v236
    %v238 = vlaneseq
    %v239 = vshrl.u32 %v238, 7
    %v240 = vsub.s32 7, %v239
    %v241 = vrot.slane %v206, %v240
    %v242 = vlaneseq
    %v243 = vshrl.u32 %v242, 7
    %v244 = vsub.s32 0, %v243
    %v245 = vrot.slane %v207, %v244
    %v246 = vlaneseq
    %v247 = vshrl.u32 %v246, 7
    %v248 = vsub.s32 1, %v247
    %v249 = vrot.slane %v207, %v248
    %v250 = vlaneseq
    %v251 = vshrl.u32 %v250, 7
    %v252 = vsub.s32 2, %v251
    %v253 = vrot.slane %v207, %v252
    %v267 = vunpack.c.l.b16 %v60
    %v268 = vunpack.c.h.b16 %v60
    %v269 = vunpack.c.l.b16 %v61
    %v270 = vunpack.c.h.b16 %v61
    %v271 = vpack.c.b16 %v269, %v267
    %v272 = vpack.c.b16 %v270, %v268
    %v418 = vunpack.c.l.b16 %v62
    %v419 = vunpack.c.h.b16 %v62
    %v420 = vunpack.c.l.b16 %v63
    %v421 = vunpack.c.h.b16 %v63
    %v422 = vunpack.c.l.b16 %v64
    %v423 = vunpack.c.h.b16 %v64
    %v424 = vunpack.c.l.b16 %v65
    %v425 = vunpack.c.h.b16 %v65
    %v426 = vunpack.c.l.b16 %v66
    %v427 = vunpack.c.h.b16 %v66
    %v428 = vunpack.c.l.b16 %v67
    %v429 = vunpack.c.l.b16 %v68
    %v430 = vunpack.c.h.b16 %v68
    %v431 = vunpack.c.l.b16 %v69
    %v432 = vunpack.c.h.b16 %v69
    %v433 = vunpack.c.l.b16 %v70
    %v434 = vunpack.c.h.b16 %v70
    %v435 = vunpack.c.l.b16 %v71
    %v436 = vunpack.c.h.b16 %v71
    %v437 = vunpack.c.l.b16 %v72
    %v438 = vunpack.c.h.b16 %v72
    %v439 = vunpack.c.l.b16 %v73
    %v440 = vunpack.c.l.b16 %v74
    %v441 = vunpack.c.h.b16 %v74
    %v442 = vunpack.c.l.b16 %v75
    %v443 = vunpack.c.h.b16 %v75
    %v444 = vunpack.c.l.b16 %v76
    %v445 = vunpack.c.h.b16 %v76
    %v446 = vunpack.c.l.b16 %v77
    %v447 = vunpack.c.h.b16 %v77
    %v448 = vunpack.c.l.b16 %v78
    %v449 = vunpack.c.h.b16 %v78
    %v450 = vunpack.c.l.b16 %v79
    %v451 = vunpack.c.l.b16 %v80
    %v452 = vunpack.c.h.b16 %v80
    %v453 = vunpack.c.l.b16 %v81
    %v454 = vunpack.c.h.b16 %v81
    %v455 = vunpack.c.l.b16 %v82
    %v456 = vunpack.c.h.b16 %v82
    %v457 = vunpack.c.l.b16 %v83
    %v458 = vunpack.c.h.b16 %v83
    %v459 = vunpack.c.l.b16 %v84
    %v460 = vunpack.c.h.b16 %v84
    %v461 = vunpack.c.l.b16 %v85
    %v462 = vunpack.c.l.b16 %v86
    %v463 = vunpack.c.h.b16 %v86
    %v464 = vunpack.c.l.b16 %v87
    %v465 = vunpack.c.h.b16 %v87
    %v466 = vunpack.c.l.b16 %v88
    %v467 = vunpack.c.h.b16 %v88
    %v468 = vunpack.c.l.b16 %v89
    %v469 = vunpack.c.h.b16 %v89
    %v470 = vunpack.c.l.b16 %v90
    %v471 = vunpack.c.h.b16 %v90
    %v472 = vunpack.c.l.b16 %v91
    %v473 = vunpack.c.l.b16 %v92
    %v474 = vunpack.c.h.b16 %v92
    %v475 = vunpack.c.l.b16 %v93
    %v476 = vunpack.c.h.b16 %v93
    %v477 = vunpack.c.l.b16 %v94
    %v478 = vunpack.c.h.b16 %v94
    %v479 = vunpack.c.l.b16 %v95
    %v480 = vunpack.c.h.b16 %v95
    %v481 = vunpack.c.l.b16 %v96
    %v482 = vunpack.c.h.b16 %v96
    %v483 = vunpack.c.l.b16 %v97
    %v484 = vunpack.c.l.b16 %v98
    %v485 = vunpack.c.h.b16 %v98
    %v486 = vunpack.c.l.b16 %v99
    %v487 = vunpack.c.h.b16 %v99
    %v488 = vunpack.c.l.b16 %v100
    %v489 = vunpack.c.h.b16 %v100
    %v490 = vunpack.c.l.b16 %v101
    %v491 = vunpack.c.h.b16 %v101
    %v492 = vunpack.c.l.b16 %v102
    %v493 = vunpack.c.h.b16 %v102
    %v494 = vunpack.c.l.b16 %v103
    %v495 = vunpack.c.l.b16 %v104
    %v496 = vunpack.c.h.b16 %v104
    %v497 = vunpack.c.l.b16 %v105
    %v498 = vunpack.c.h.b16 %v105
    %v499 = vunpack.c.l.b16 %v106
    %v500 = vunpack.c.h.b16 %v106
    %v501 = vunpack.c.l.b16 %v107
    %v502 = vunpack.c.h.b16 %v107
    %v503 = vunpack.c.l.b16 %v108
    %v504 = vunpack.c.h.b16 %v108
    %v505 = vunpack.c.l.b16 %v109
    %v506 = vunpack.c.l.b16 %v110
    %v507 = vunpack.c.h.b16 %v110
    %v508 = vunpack.c.l.b16 %v111
    %v509 = vunpack.c.h.b16 %v111
    %v510 = vunpack.c.l.b16 %v112
    %v511 = vunpack.c.h.b16 %v112
    %v512 = vunpack.c.l.b16 %v113
    %v513 = vunpack.c.h.b16 %v113
    %v514 = vunpack.c.l.b16 %v114
    %v515 = vunpack.c.h.b16 %v114
    %v516 = vunpack.c.l.b16 %v115
    %v517 = vunpack.c.l.b16 %v116
    %v518 = vunpack.c.h.b16 %v116
    %v519 = vunpack.c.l.b16 %v117
    %v520 = vunpack.c.h.b16 %v117
    %v521 = vunpack.c.l.b16 %v118
    %v522 = vunpack.c.h.b16 %v118
    %v523 = vunpack.c.l.b16 %v119
    %v524 = vunpack.c.h.b16 %v119
    %v525 = vunpack.c.l.b16 %v120
    %v526 = vunpack.c.h.b16 %v120
    %v527 = vunpack.c.l.b16 %v121
    %v528 = vunpack.c.l.b16 %v122
    %v529 = vunpack.c.h.b16 %v122
    %v530 = vunpack.c.l.b16 %v123
    %v531 = vunpack.c.h.b16 %v123
    %v532 = vunpack.c.l.b16 %v124
    %v533 = vunpack.c.h.b16 %v124
    %v534 = vunpack.c.l.b16 %v125
    %v535 = vunpack.c.h.b16 %v125
    %v536 = vunpack.c.l.b16 %v126
    %v537 = vunpack.c.h.b16 %v126
    %v538 = vunpack.c.l.b16 %v127
    %v539 = vunpack.c.l.b16 %v128
    %v540 = vunpack.c.h.b16 %v128
    %v541 = vunpack.c.l.b16 %v129
    %v542 = vunpack.c.h.b16 %v129
    %v543 = vunpack.c.l.b16 %v130
    %v544 = vunpack.c.h.b16 %v130
    %v545 = vunpack.c.l.b16 %v131
    %v546 = vunpack.c.h.b16 %v131
    %v547 = vunpack.c.l.b16 %v132
    %v548 = vunpack.c.h.b16 %v132
    %v549 = vunpack.c.l.b16 %v133
    %v550 = vunpack.c.l.b16 %v134
    %v551 = vunpack.c.h.b16 %v134
    %v552 = vunpack.c.l.b16 %v135
    %v553 = vunpack.c.h.b16 %v135
    %v554 = vunpack.c.l.b16 %v136
    %v555 = vunpack.c.h.b16 %v136
    %v556 = vunpack.c.l.b16 %v137
    %v557 = vunpack.c.h.b16 %v137
    %v558 = vunpack.c.l.b16 %v138
    %v559 = vunpack.c.h.b16 %v138
    %v560 = vunpack.c.l.b16 %v139
    %v561 = vunpack.c.l.b16 %v140
    %v562 = vunpack.c.h.b16 %v140
    %v563 = vunpack.c.l.b16 %v141
    %v564 = vunpack.c.h.b16 %v141
    %v565 = vunpack.c.l.b16 %v142
    %v566 = vunpack.c.h.b16 %v142
    %v567 = vunpack.c.l.b16 %v143
    %v568 = vunpack.c.h.b16 %v143
    %v569 = vunpack.c.l.b16 %v144
    %v570 = vunpack.c.h.b16 %v144
    %v571 = vunpack.c.l.b16 %v145
    %v572 = vunpack.c.l.b16 %v146
    %v573 = vunpack.c.h.b16 %v146
    %v574 = vunpack.c.l.b16 %v147
    %v575 = vunpack.c.h.b16 %v147
    %v576 = vunpack.c.l.b16 %v148
    %v577 = vunpack.c.h.b16 %v148
    %v578 = vunpack.c.l.b16 %v149
    %v579 = vunpack.c.h.b16 %v149
    %v580 = vunpack.c.l.b16 %v150
    %v581 = vunpack.c.h.b16 %v150
    %v582 = vunpack.c.l.b16 %v151
    %v583 = vunpack.c.l.b16 %v152
    %v584 = vunpack.c.h.b16 %v152
    %v585 = vunpack.c.l.b16 %v153
    %v586 = vunpack.c.h.b16 %v153
    %v587 = vunpack.c.l.b16 %v154
    %v588 = vunpack.c.h.b16 %v154
    %v589 = vunpack.c.l.b16 %v155
    %v590 = vunpack.c.h.b16 %v155
    %v591 = vunpack.c.l.b16 %v156
    %v592 = vunpack.c.h.b16 %v156
    %v593 = vunpack.c.l.b16 %v157
    %v594 = vunpack.c.l.b16 %v158
    %v595 = vunpack.c.h.b16 %v158
    %v596 = vunpack.c.l.b16 %v159
    %v597 = vunpack.c.h.b16 %v159
    %v598 = vunpack.c.l.b16 %v160
    %v599 = vunpack.c.h.b16 %v160
    %v600 = vunpack.c.l.b16 %v161
    %v601 = vunpack.c.h.b16 %v161
    %v602 = vunpack.c.l.b16 %v162
    %v603 = vunpack.c.h.b16 %v162
    %v604 = vunpack.c.l.b16 %v163
    %v605 = vunpack.c.l.b16 %v164
    %v606 = vunpack.c.h.b16 %v164
    %v607 = vunpack.c.l.b16 %v165
    %v608 = vunpack.c.h.b16 %v165
    %v609 = vunpack.c.l.b16 %v166
    %v610 = vunpack.c.h.b16 %v166
    %v611 = vunpack.c.l.b16 %v167
    %v612 = vunpack.c.h.b16 %v167
    %v613 = vunpack.c.l.b16 %v168
    %v614 = vunpack.c.h.b16 %v168
    %v615 = vunpack.c.l.b16 %v169
    %v616 = vunpack.c.l.b16 %v170
    %v617 = vunpack.c.h.b16 %v170
    %v618 = vunpack.c.l.b16 %v171
    %v619 = vunpack.c.h.b16 %v171
    %v620 = vunpack.c.l.b16 %v172
    %v621 = vunpack.c.h.b16 %v172
    %v622 = vunpack.c.l.b16 %v173
    %v623 = vunpack.c.h.b16 %v173
    %v624 = vunpack.c.l.b16 %v174
    %v625 = vunpack.c.h.b16 %v174
    %v626 = vunpack.c.l.b16 %v175
    %v627 = vunpack.c.l.b16 %v176
    %v628 = vunpack.c.h.b16 %v176
    %v629 = vunpack.c.l.b16 %v177
    %v630 = vunpack.c.h.b16 %v177
    %v631 = vunpack.c.l.b16 %v178
    %v632 = vunpack.c.h.b16 %v178
    %v633 = vunpack.c.l.b16 %v179
    %v634 = vunpack.c.h.b16 %v179
    %v635 = vunpack.c.l.b16 %v180
    %v636 = vunpack.c.h.b16 %v180
    %v637 = vunpack.c.l.b16 %v181
    %v638 = vunpack.c.l.b16 %v182
    %v639 = vunpack.c.h.b16 %v182
    %v640 = vunpack.c.l.b16 %v183
    %v641 = vunpack.c.h.b16 %v183
    %v642 = vunpack.c.l.b16 %v184
    %v643 = vunpack.c.h.b16 %v184
    %v644 = vunpack.c.l.b16 %v185
    %v645 = vunpack.c.h.b16 %v185
    %v646 = vunpack.c.l.b16 %v186
    %v647 = vunpack.c.h.b16 %v186
    %v648 = vunpack.c.l.b16 %v187
    %v649 = vunpack.c.l.b16 %v188
    %v650 = vunpack.c.h.b16 %v188
    %v651 = vunpack.c.l.b16 %v189
    %v652 = vunpack.c.h.b16 %v189
    %v653 = vunpack.c.l.b16 %v190
    %v654 = vunpack.c.h.b16 %v190
    %v655 = vunpack.c.l.b16 %v191
    %v656 = vunpack.c.h.b16 %v191
    %v657 = vunpack.c.l.b16 %v192
    %v658 = vunpack.c.h.b16 %v192
    %v659 = vunpack.c.l.b16 %v193
    %v660 = vunpack.c.l.b16 %v194
    %v661 = vunpack.c.h.b16 %v194
    %v662 = vunpack.c.l.b16 %v195
    %v663 = vunpack.c.h.b16 %v195
    %v664 = vunpack.c.l.b16 %v196
    %v665 = vunpack.c.h.b16 %v196
    %v666 = vunpack.c.l.b16 %v197
    %v667 = vunpack.c.h.b16 %v197
    %v668 = vunpack.c.l.b16 %v198
    %v669 = vunpack.c.h.b16 %v198
    %v670 = vunpack.c.l.b16 %v199
    %v671 = vunpack.c.l.b16 %v200
    %v672 = vunpack.c.h.b16 %v200
    %v673 = vunpack.c.l.b16 %v201
    %v674 = vunpack.c.h.b16 %v201
    %v675 = vunpack.c.l.b16 %v202
    %v676 = vunpack.c.h.b16 %v202
    %v677 = vunpack.c.l.b16 %v203
    %v678 = vunpack.c.h.b16 %v203
    %v679 = vunpack.c.l.b16 %v204
    %v680 = vunpack.c.h.b16 %v204
    %v681 = vunpack.c.l.b16 %v205
    %v682 = vpack.c.b16 %v429, %v418
    %v683 = vpack.c.b16 %v430, %v419
    %v684 = vpack.c.b16 %v431, %v420
    %v685 = vpack.c.b16 %v432, %v421
    %v686 = vpack.c.b16 %v433, %v422
    %v687 = vpack.c.b16 %v434, %v423
    %v688 = vpack.c.b16 %v435, %v424
    %v689 = vpack.c.b16 %v436, %v425
    %v690 = vpack.c.b16 %v437, %v426
    %v691 = vpack.c.b16 %v438, %v427
    %v692 = vpack.c.b16 %v439, %v428
    %v693 = vpack.c.b16 %v451, %v440
    %v694 = vpack.c.b16 %v452, %v441
    %v695 = vpack.c.b16 %v453, %v442
    %v696 = vpack.c.b16 %v454, %v443
    %v697 = vpack.c.b16 %v455, %v444
    %v698 = vpack.c.b16 %v456, %v445
    %v699 = vpack.c.b16 %v457, %v446
    %v700 = vpack.c.b16 %v458, %v447
    %v701 = vpack.c.b16 %v459, %v448
    %v702 = vpack.c.b16 %v460, %v449
    %v703 = vpack.c.b16 %v461, %v450
    %v704 = vpack.c.b16 %v473, %v462
    %v705 = vpack.c.b16 %v474, %v463
    %v706 = vpack.c.b16 %v475, %v464
    %v707 = vpack.c.b16 %v476, %v465
    %v708 = vpack.c.b16 %v477, %v466
    %v709 = vpack.c.b16 %v478, %v467
    %v710 = vpack.c.b16 %v479, %v468
    %v711 = vpack.c.b16 %v480, %v469
    %v712 = vpack.c.b16 %v481, %v470
    %v713 = vpack.c.b16 %v482, %v471
    %v714 = vpack.c.b16 %v483, %v472
    %v715 = vpack.c.b16 %v495, %v484
    %v716 = vpack.c.b16 %v496, %v485
    %v717 = vpack.c.b16 %v497, %v486
    %v718 = vpack.c.b16 %v498, %v487
    %v719 = vpack.c.b16 %v499, %v488
    %v720 = vpack.c.b16 %v500, %v489
    %v721 = vpack.c.b16 %v501, %v490
    %v722 = vpack.c.b16 %v502, %v491
    %v723 = vpack.c.b16 %v503, %v492
    %v724 = vpack.c.b16 %v504, %v493
    %v725 = vpack.c.b16 %v505, %v494
    %v726 = vpack.c.b16 %v517, %v506
    %v727 = vpack.c.b16 %v518, %v507
    %v728 = vpack.c.b16 %v519, %v508
    %v729 = vpack.c.b16 %v520, %v509
    %v730 = vpack.c.b16 %v521, %v510
    %v731 = vpack.c.b16 %v522, %v511
    %v732 = vpack.c.b16 %v523, %v512
    %v733 = vpack.c.b16 %v524, %v513
    %v734 = vpack.c.b16 %v525, %v514
    %v735 = vpack.c.b16 %v526, %v515
    %v736 = vpack.c.b16 %v527, %v516
    %v737 = vpack.c.b16 %v539, %v528
    %v738 = vpack.c.b16 %v540, %v529
    %v739 = vpack.c.b16 %v541, %v530
    %v740 = vpack.c.b16 %v542, %v531
    %v741 = vpack.c.b16 %v543, %v532
    %v742 = vpack.c.b16 %v544, %v533
    %v743 = vpack.c.b16 %v545, %v534
    %v744 = vpack.c.b16 %v546, %v535
    %v745 = vpack.c.b16 %v547, %v536
    %v746 = vpack.c.b16 %v548, %v537
    %v747 = vpack.c.b16 %v549, %v538
    %v748 = vpack.c.b16 %v561, %v550
    %v749 = vpack.c.b16 %v562, %v551
    %v750 = vpack.c.b16 %v563, %v552
    %v751 = vpack.c.b16 %v564, %v553
    %v752 = vpack.c.b16 %v565, %v554
    %v753 = vpack.c.b16 %v566, %v555
    %v754 = vpack.c.b16 %v567, %v556
    %v755 = vpack.c.b16 %v568, %v557
    %v756 = vpack.c.b16 %v569, %v558
    %v757 = vpack.c.b16 %v570, %v559
    %v758 = vpack.c.b16 %v571, %v560
    %v759 = vpack.c.b16 %v583, %v572
    %v760 = vpack.c.b16 %v584, %v573
    %v761 = vpack.c.b16 %v585, %v574
    %v762 = vpack.c.b16 %v586, %v575
    %v763 = vpack.c.b16 %v587, %v576
    %v764 = vpack.c.b16 %v588, %v577
    %v765 = vpack.c.b16 %v589, %v578
    %v766 = vpack.c.b16 %v590, %v579
    %v767 = vpack.c.b16 %v591, %v580
    %v768 = vpack.c.b16 %v592, %v581
    %v769 = vpack.c.b16 %v593, %v582
    %v770 = vpack.c.b16 %v605, %v594
    %v771 = vpack.c.b16 %v606, %v595
    %v772 = vpack.c.b16 %v607, %v596
    %v773 = vpack.c.b16 %v608, %v597
    %v774 = vpack.c.b16 %v609, %v598
    %v775 = vpack.c.b16 %v610, %v599
    %v776 = vpack.c.b16 %v611, %v600
    %v777 = vpack.c.b16 %v612, %v601
    %v778 = vpack.c.b16 %v613, %v602
    %v779 = vpack.c.b16 %v614, %v603
    %v780 = vpack.c.b16 %v615, %v604
    %v781 = vpack.c.b16 %v627, %v616
    %v782 = vpack.c.b16 %v628, %v617
    %v783 = vpack.c.b16 %v629, %v618
    %v784 = vpack.c.b16 %v630, %v619
    %v785 = vpack.c.b16 %v631, %v620
    %v786 = vpack.c.b16 %v632, %v621
    %v787 = vpack.c.b16 %v633, %v622
    %v788 = vpack.c.b16 %v634, %v623
    %v789 = vpack.c.b16 %v635, %v624
    %v790 = vpack.c.b16 %v636, %v625
    %v791 = vpack.c.b16 %v637, %v626
    %v792 = vpack.c.b16 %v649, %v638
    %v793 = vpack.c.b16 %v650, %v639
    %v794 = vpack.c.b16 %v651, %v640
    %v795 = vpack.c.b16 %v652, %v641
    %v796 = vpack.c.b16 %v653, %v642
    %v797 = vpack.c.b16 %v654, %v643
    %v798 = vpack.c.b16 %v655, %v644
    %v799 = vpack.c.b16 %v656, %v645
    %v800 = vpack.c.b16 %v657, %v646
    %v801 = vpack.c.b16 %v658, %v647
    %v802 = vpack.c.b16 %v659, %v648
    %v803 = vpack.c.b16 %v671, %v660
    %v804 = vpack.c.b16 %v672, %v661
    %v805 = vpack.c.b16 %v673, %v662
    %v806 = vpack.c.b16 %v674, %v663
    %v807 = vpack.c.b16 %v675, %v664
    %v808 = vpack.c.b16 %v676, %v665
    %v809 = vpack.c.b16 %v677, %v666
    %v810 = vpack.c.b16 %v678, %v667
    %v811 = vpack.c.b16 %v679, %v668
    %v812 = vpack.c.b16 %v680, %v669
    %v813 = vpack.c.b16 %v681, %v670
    %vm946 = vcmask 523264
    %v948 = vsel %vm946, %v272, 0
    %950 = vmatprep.subr.bf16.mxu0 %v683
    %951 = vmatpush1.bf16.msra.mxu0 %v682
    %952 = vmatprep.subr.bf16.mxu0 %v694
    %953 = vmatpush1.bf16.msra.mxu0 %v693
    %954 = vmatprep.subr.bf16.mxu0 %v705
    %955 = vmatpush1.bf16.msra.mxu0 %v704
    %956 = vmatprep.subr.bf16.mxu0 %v716
    %957 = vmatpush1.bf16.msra.mxu0 %v715
    %958 = vmatprep.subr.bf16.mxu0 %v727
    %959 = vmatpush1.bf16.msra.mxu0 %v726
    %960 = vmatprep.subr.bf16.mxu0 %v738
    %961 = vmatpush1.bf16.msra.mxu0 %v737
    %962 = vmatprep.subr.bf16.mxu0 %v749
    %963 = vmatpush1.bf16.msra.mxu0 %v748
    %964 = vmatprep.subr.bf16.mxu0 %v760
    %965 = vmatpush1.bf16.msra.mxu0 %v759
    %966 = vmatprep.subr.bf16.mxu0 %v771
    %967 = vmatpush1.bf16.msra.mxu0 %v770
    %968 = vmatprep.subr.bf16.mxu0 %v782
    %969 = vmatpush1.bf16.msra.mxu0 %v781
    %970 = vmatprep.subr.bf16.mxu0 %v793
    %971 = vmatpush1.bf16.msra.mxu0 %v792
    %972 = vmatprep.subr.bf16.mxu0 %v804
    %973 = vmatpush1.bf16.msra.mxu0 %v803
    %974 = vmatprep.subr.bf16.mxu0 0
    %975 = vmatpush1.bf16.msra.mxu0 0
    %976 = vmatprep.subr.bf16.mxu0 0
    %977 = vmatpush1.bf16.msra.mxu0 0
    %978 = vmatprep.subr.bf16.mxu0 0
    %979 = vmatpush1.bf16.msra.mxu0 0
    %980 = vmatprep.subr.bf16.mxu0 0
    %981 = vmatpush1.bf16.msra.mxu0 0
    %982 = vmatprep.mubr.bf16.mxu0 %v948
    %983 = vmatmul.mubr.bf16.gmra.mrb[0].mxu0 %v271
    %v984 = vpop.f32.mrb[0].mxu0
    %v985 = vadd.f32 %v213, %v984
    %v986 = vpop.f32.mrb[0].mxu0
    %v987 = vadd.f32 %v217, %v986
    %v988 = vpop.f32.mrb[0].mxu0
    %v989 = vadd.f32 %v213, %v988
    %v990 = vpop.f32.mrb[0].mxu0
    %v991 = vadd.f32 %v217, %v990
    %992 = vdwg.mxu0
    %993 = vmatprep.subr.bf16.mxu0 %v685
    %994 = vmatpush1.bf16.msra.mxu0 %v684
    %995 = vmatprep.subr.bf16.mxu0 %v696
    %996 = vmatpush1.bf16.msra.mxu0 %v695
    %997 = vmatprep.subr.bf16.mxu0 %v707
    %998 = vmatpush1.bf16.msra.mxu0 %v706
    %999 = vmatprep.subr.bf16.mxu0 %v718
    %1000 = vmatpush1.bf16.msra.mxu0 %v717
    %1001 = vmatprep.subr.bf16.mxu0 %v729
    %1002 = vmatpush1.bf16.msra.mxu0 %v728
    %1003 = vmatprep.subr.bf16.mxu0 %v740
    %1004 = vmatpush1.bf16.msra.mxu0 %v739
    %1005 = vmatprep.subr.bf16.mxu0 %v751
    %1006 = vmatpush1.bf16.msra.mxu0 %v750
    %1007 = vmatprep.subr.bf16.mxu0 %v762
    %1008 = vmatpush1.bf16.msra.mxu0 %v761
    %1009 = vmatprep.subr.bf16.mxu0 %v773
    %1010 = vmatpush1.bf16.msra.mxu0 %v772
    %1011 = vmatprep.subr.bf16.mxu0 %v784
    %1012 = vmatpush1.bf16.msra.mxu0 %v783
    %1013 = vmatprep.subr.bf16.mxu0 %v795
    %1014 = vmatpush1.bf16.msra.mxu0 %v794
    %1015 = vmatprep.subr.bf16.mxu0 %v806
    %1016 = vmatpush1.bf16.msra.mxu0 %v805
    %1017 = vmatprep.subr.bf16.mxu0 0
    %1018 = vmatpush1.bf16.msra.mxu0 0
    %1019 = vmatprep.subr.bf16.mxu0 0
    %1020 = vmatpush1.bf16.msra.mxu0 0
    %1021 = vmatprep.subr.bf16.mxu0 0
    %1022 = vmatpush1.bf16.msra.mxu0 0
    %1023 = vmatprep.subr.bf16.mxu0 0
    %1024 = vmatpush1.bf16.msra.mxu0 0
    %1025 = vmatprep.mubr.bf16.mxu0 %v948
    %1026 = vmatmul.mubr.bf16.gmra.mrb[0].mxu0 %v271
    %v1027 = vpop.f32.mrb[0].mxu0
    %v1028 = vadd.f32 %v221, %v1027
    %v1029 = vpop.f32.mrb[0].mxu0
    %v1030 = vadd.f32 %v225, %v1029
    %v1031 = vpop.f32.mrb[0].mxu0
    %v1032 = vadd.f32 %v221, %v1031
    %v1033 = vpop.f32.mrb[0].mxu0
    %v1034 = vadd.f32 %v225, %v1033
    %1035 = vdwg.mxu0
    %1036 = vmatprep.subr.bf16.mxu0 %v687
    %1037 = vmatpush1.bf16.msra.mxu0 %v686
    %1038 = vmatprep.subr.bf16.mxu0 %v698
    %1039 = vmatpush1.bf16.msra.mxu0 %v697
    %1040 = vmatprep.subr.bf16.mxu0 %v709
    %1041 = vmatpush1.bf16.msra.mxu0 %v708
    %1042 = vmatprep.subr.bf16.mxu0 %v720
    %1043 = vmatpush1.bf16.msra.mxu0 %v719
    %1044 = vmatprep.subr.bf16.mxu0 %v731
    %1045 = vmatpush1.bf16.msra.mxu0 %v730
    %1046 = vmatprep.subr.bf16.mxu0 %v742
    %1047 = vmatpush1.bf16.msra.mxu0 %v741
    %1048 = vmatprep.subr.bf16.mxu0 %v753
    %1049 = vmatpush1.bf16.msra.mxu0 %v752
    %1050 = vmatprep.subr.bf16.mxu0 %v764
    %1051 = vmatpush1.bf16.msra.mxu0 %v763
    %1052 = vmatprep.subr.bf16.mxu0 %v775
    %1053 = vmatpush1.bf16.msra.mxu0 %v774
    %1054 = vmatprep.subr.bf16.mxu0 %v786
    %1055 = vmatpush1.bf16.msra.mxu0 %v785
    %1056 = vmatprep.subr.bf16.mxu0 %v797
    %1057 = vmatpush1.bf16.msra.mxu0 %v796
    %1058 = vmatprep.subr.bf16.mxu0 %v808
    %1059 = vmatpush1.bf16.msra.mxu0 %v807
    %1060 = vmatprep.subr.bf16.mxu0 0
    %1061 = vmatpush1.bf16.msra.mxu0 0
    %1062 = vmatprep.subr.bf16.mxu0 0
    %1063 = vmatpush1.bf16.msra.mxu0 0
    %1064 = vmatprep.subr.bf16.mxu0 0
    %1065 = vmatpush1.bf16.msra.mxu0 0
    %1066 = vmatprep.subr.bf16.mxu0 0
    %1067 = vmatpush1.bf16.msra.mxu0 0
    %1068 = vmatprep.mubr.bf16.mxu0 %v948
    %1069 = vmatmul.mubr.bf16.gmra.mrb[0].mxu0 %v271
    %v1070 = vpop.f32.mrb[0].mxu0
    %v1071 = vadd.f32 %v229, %v1070
    %v1072 = vpop.f32.mrb[0].mxu0
    %v1073 = vadd.f32 %v233, %v1072
    %v1074 = vpop.f32.mrb[0].mxu0
    %v1075 = vadd.f32 %v229, %v1074
    %v1076 = vpop.f32.mrb[0].mxu0
    %v1077 = vadd.f32 %v233, %v1076
    %1078 = vdwg.mxu0
    %1079 = vmatprep.subr.bf16.mxu0 %v689
    %1080 = vmatpush1.bf16.msra.mxu0 %v688
    %1081 = vmatprep.subr.bf16.mxu0 %v700
    %1082 = vmatpush1.bf16.msra.mxu0 %v699
    %1083 = vmatprep.subr.bf16.mxu0 %v711
    %1084 = vmatpush1.bf16.msra.mxu0 %v710
    %1085 = vmatprep.subr.bf16.mxu0 %v722
    %1086 = vmatpush1.bf16.msra.mxu0 %v721
    %1087 = vmatprep.subr.bf16.mxu0 %v733
    %1088 = vmatpush1.bf16.msra.mxu0 %v732
    %1089 = vmatprep.subr.bf16.mxu0 %v744
    %1090 = vmatpush1.bf16.msra.mxu0 %v743
    %1091 = vmatprep.subr.bf16.mxu0 %v755
    %1092 = vmatpush1.bf16.msra.mxu0 %v754
    %1093 = vmatprep.subr.bf16.mxu0 %v766
    %1094 = vmatpush1.bf16.msra.mxu0 %v765
    %1095 = vmatprep.subr.bf16.mxu0 %v777
    %1096 = vmatpush1.bf16.msra.mxu0 %v776
    %1097 = vmatprep.subr.bf16.mxu0 %v788
    %1098 = vmatpush1.bf16.msra.mxu0 %v787
    %1099 = vmatprep.subr.bf16.mxu0 %v799
    %1100 = vmatpush1.bf16.msra.mxu0 %v798
    %1101 = vmatprep.subr.bf16.mxu0 %v810
    %1102 = vmatpush1.bf16.msra.mxu0 %v809
    %1103 = vmatprep.subr.bf16.mxu0 0
    %1104 = vmatpush1.bf16.msra.mxu0 0
    %1105 = vmatprep.subr.bf16.mxu0 0
    %1106 = vmatpush1.bf16.msra.mxu0 0
    %1107 = vmatprep.subr.bf16.mxu0 0
    %1108 = vmatpush1.bf16.msra.mxu0 0
    %1109 = vmatprep.subr.bf16.mxu0 0
    %1110 = vmatpush1.bf16.msra.mxu0 0
    %1111 = vmatprep.mubr.bf16.mxu0 %v948
    %1112 = vmatmul.mubr.bf16.gmra.mrb[0].mxu0 %v271
    %v1113 = vpop.f32.mrb[0].mxu0
    %v1114 = vadd.f32 %v237, %v1113
    %v1115 = vpop.f32.mrb[0].mxu0
    %v1116 = vadd.f32 %v241, %v1115
    %v1117 = vpop.f32.mrb[0].mxu0
    %v1118 = vadd.f32 %v237, %v1117
    %v1119 = vpop.f32.mrb[0].mxu0
    %v1120 = vadd.f32 %v241, %v1119
    %1121 = vdwg.mxu0
    %1122 = vmatprep.subr.bf16.mxu0 %v691
    %1123 = vmatpush1.bf16.msra.mxu0 %v690
    %1124 = vmatprep.subr.bf16.mxu0 %v702
    %1125 = vmatpush1.bf16.msra.mxu0 %v701
    %1126 = vmatprep.subr.bf16.mxu0 %v713
    %1127 = vmatpush1.bf16.msra.mxu0 %v712
    %1128 = vmatprep.subr.bf16.mxu0 %v724
    %1129 = vmatpush1.bf16.msra.mxu0 %v723
    %1130 = vmatprep.subr.bf16.mxu0 %v735
    %1131 = vmatpush1.bf16.msra.mxu0 %v734
    %1132 = vmatprep.subr.bf16.mxu0 %v746
    %1133 = vmatpush1.bf16.msra.mxu0 %v745
    %1134 = vmatprep.subr.bf16.mxu0 %v757
    %1135 = vmatpush1.bf16.msra.mxu0 %v756
    %1136 = vmatprep.subr.bf16.mxu0 %v768
    %1137 = vmatpush1.bf16.msra.mxu0 %v767
    %1138 = vmatprep.subr.bf16.mxu0 %v779
    %1139 = vmatpush1.bf16.msra.mxu0 %v778
    %1140 = vmatprep.subr.bf16.mxu0 %v790
    %1141 = vmatpush1.bf16.msra.mxu0 %v789
    %1142 = vmatprep.subr.bf16.mxu0 %v801
    %1143 = vmatpush1.bf16.msra.mxu0 %v800
    %1144 = vmatprep.subr.bf16.mxu0 %v812
    %1145 = vmatpush1.bf16.msra.mxu0 %v811
    %1146 = vmatprep.subr.bf16.mxu0 0
    %1147 = vmatpush1.bf16.msra.mxu0 0
    %1148 = vmatprep.subr.bf16.mxu0 0
    %1149 = vmatpush1.bf16.msra.mxu0 0
    %1150 = vmatprep.subr.bf16.mxu0 0
    %1151 = vmatpush1.bf16.msra.mxu0 0
    %1152 = vmatprep.subr.bf16.mxu0 0
    %1153 = vmatpush1.bf16.msra.mxu0 0
    %1154 = vmatprep.mubr.bf16.mxu0 %v948
    %1155 = vmatmul.mubr.bf16.gmra.mrb[0].mxu0 %v271
    %v1156 = vpop.f32.mrb[0].mxu0
    %v1157 = vadd.f32 %v245, %v1156
    %v1158 = vpop.f32.mrb[0].mxu0
    %v1159 = vadd.f32 %v249, %v1158
    %v1160 = vpop.f32.mrb[0].mxu0
    %v1161 = vadd.f32 %v245, %v1160
    %v1162 = vpop.f32.mrb[0].mxu0
    %v1163 = vadd.f32 %v249, %v1162
    %1164 = vdwg.mxu0
    %1165 = vmatprep.subr.bf16.mxu0 0
    %1166 = vmatpush1.bf16.msra.mxu0 %v692
    %1167 = vmatprep.subr.bf16.mxu0 0
    %1168 = vmatpush1.bf16.msra.mxu0 %v703
    %1169 = vmatprep.subr.bf16.mxu0 0
    %1170 = vmatpush1.bf16.msra.mxu0 %v714
    %1171 = vmatprep.subr.bf16.mxu0 0
    %1172 = vmatpush1.bf16.msra.mxu0 %v725
    %1173 = vmatprep.subr.bf16.mxu0 0
    %1174 = vmatpush1.bf16.msra.mxu0 %v736
    %1175 = vmatprep.subr.bf16.mxu0 0
    %1176 = vmatpush1.bf16.msra.mxu0 %v747
    %1177 = vmatprep.subr.bf16.mxu0 0
    %1178 = vmatpush1.bf16.msra.mxu0 %v758
    %1179 = vmatprep.subr.bf16.mxu0 0
    %1180 = vmatpush1.bf16.msra.mxu0 %v769
    %1181 = vmatprep.subr.bf16.mxu0 0
    %1182 = vmatpush1.bf16.msra.mxu0 %v780
    %1183 = vmatprep.subr.bf16.mxu0 0
    %1184 = vmatpush1.bf16.msra.mxu0 %v791
    %1185 = vmatprep.subr.bf16.mxu0 0
    %1186 = vmatpush1.bf16.msra.mxu0 %v802
    %1187 = vmatprep.subr.bf16.mxu0 0
    %1188 = vmatpush1.bf16.msra.mxu0 %v813
    %1189 = vmatprep.subr.bf16.mxu0 0
    %1190 = vmatpush1.bf16.msra.mxu0 0
    %1191 = vmatprep.subr.bf16.mxu0 0
    %1192 = vmatpush1.bf16.msra.mxu0 0
    %1193 = vmatprep.subr.bf16.mxu0 0
    %1194 = vmatpush1.bf16.msra.mxu0 0
    %1195 = vmatprep.subr.bf16.mxu0 0
    %1196 = vmatpush1.bf16.msra.mxu0 0
    %1197 = vmatprep.mubr.bf16.mxu0 %v948
    %1198 = vmatmul.mubr.bf16.gmra.mrb[0].mxu0 %v271
    %v1199 = vpop.f32.mrb[0].mxu0
    %v1200 = vadd.f32 %v253, %v1199
    %v1201 = vpop.f32.mrb[0].mxu0
    %v1202 = vpop.f32.mrb[0].mxu0
    %v1203 = vadd.f32 %v253, %v1202
    %v1204 = vpop.f32.mrb[0].mxu0
    %1205 = vdwg.mxu0
    %v1206 = vmax.f32 %v985, %v987
    %v1207 = vmax.f32 %v989, %v991
    %v1208 = vmax.f32 %v1206, %v1028
    %v1209 = vmax.f32 %v1207, %v1032
    %v1210 = vmax.f32 %v1208, %v1030
    %v1211 = vmax.f32 %v1209, %v1034
    %v1212 = vmax.f32 %v1210, %v1071
    %v1213 = vmax.f32 %v1211, %v1075
    %v1214 = vmax.f32 %v1212, %v1073
    %v1215 = vmax.f32 %v1213, %v1077
    %v1216 = vmax.f32 %v1214, %v1114
    %v1217 = vmax.f32 %v1215, %v1118
    %v1218 = vmax.f32 %v1216, %v1116
    %v1219 = vmax.f32 %v1217, %v1120
    %v1220 = vmax.f32 %v1218, %v1157
    %v1221 = vmax.f32 %v1219, %v1161
    %v1222 = vmax.f32 %v1220, %v1159
    %v1223 = vmax.f32 %v1221, %v1163
    %v1224 = vmax.f32 %v1222, %v1200
    %v1225 = vmax.f32 %v1223, %v1203
    %v1226 = vtanh.pop %v1224
    %v1227 = vtanh.pop %v1225
    %vm1228 = vcmask 785408
    %1229 = vst.msk [vmem:[#allocation8] sm:$0xff] %vm1228, %v1226
    %1230 = vst.msk [vmem:[#allocation8 + $0x8] sm:$0xff] %vm1228, %v1227
    %v1231 = vld [vmem:[#allocation5] sm:$0xff]
    %v1232 = vld [vmem:[#allocation5 + $0x8] sm:$0xff]
    %1235 = vrot.lane.b32.xlu0 %v1231, 96
    %v1236 = vpop.permute.xlu0 %1235
    %1237 = vrot.lane.b32.xlu0 %v1232, 96
    %v1238 = vpop.permute.xlu0 %1237
    %vm1241 = vcmask 1048320
    %1242 = vst.msk [vmem:[#allocation8] sm:$0xff] %vm1241, %v1236
    %1243 = vst.msk [vmem:[#allocation8 + $0x8] sm:$0xff] %vm1241, %v1238
    // Predicated region
    $region30: #{tpu_custom_call.1} parent=1 // pred_check
      _
    $region31: #{tpu_custom_call.1} parent=1 // pred_check_branch
      %1245 = sbr.rel (0) target = $region33
    $region32: #{tpu_custom_call.1} parent=1 // pred_region
      %s1247 = ssub.s32 256, 256
      %1248 = vsyncadd [#allocation4], %s1247
      %s1249 = sshll.u32 [#allocation8], 4
      %s1250 = int_to_ptr.vmem [resolvable:$true] %s1249
      %1255 = dma.vmem_to_hbm [thread:$0]  %s1250, 256, %s4, [#allocation4], 128, 128, 8
    $region33: #{tpu_custom_call.1} parent=1 // pred_fallthru
      _
    // Predicated region
    $region34: #{tpu_custom_call.1} parent=1 // pred_check
      _
    $region35: #{tpu_custom_call.1} parent=1 // pred_check_branch
      %1257 = sbr.rel (0) target = $region37
    $region36: #{tpu_custom_call.1} parent=1 // pred_region
      %1258 = dma.done [#allocation4], 256
    $region37: #{tpu_custom_call.1} parent=1 // pred_fallthru
      _
    %1259 = vsyncpa [#allocation3], 1
    %1260 = vsyncpa [#allocation6], 1
    %1261 = vsyncpa [#allocation4], 1

</llo_original>
